<compile_context>
chip_gen: v6e
topology: v6e:2x2x1
jax: 0.10.0
libtpu: 0.0.40
codegen_flags: <defaults>
</compile_context>

<pallas_src>
import jax
import jax.numpy as jnp
from jax.experimental import pallas as pl
from jax.experimental.pallas import tpu as pltpu


def _fc_affine_kernel(x_ref, w_ref, b_ref, o_ref):
    """o = W @ x + b with the batch dimension on the lane axis.

    x_ref: (f_in, tile_n)   w_ref: (n_out, f_in)   b_ref: (n_out, 1)
    o_ref: (n_out, tile_n)
    """
    f_in, tile_n = x_ref.shape
    n_out = w_ref.shape[0]
    if f_in <= 16:
        # Tiny contraction dim: pure VPU broadcast-FMA (no MXU pass, no MRF pop).
        wt = w_ref[...].astype(jnp.float32)                       # (n_out, f_in), tiny
        acc = jnp.broadcast_to(b_ref[...].astype(jnp.float32), (n_out, tile_n))
        for k in range(f_in):                                     # static, f_in <= 16
            acc = acc + wt[:, k:k + 1] * x_ref[k:k + 1, :].astype(jnp.float32)
    else:
        # Larger f_in: a single lane-dense MXU matmul per tile is fine.
        acc = jnp.dot(w_ref[...], x_ref[...],
                      preferred_element_type=jnp.float32) + b_ref[...]
    o_ref[...] = acc.astype(o_ref.dtype)


def fc_net_forward(x, params, *, tile_n=65536, out_dtype=None):
    """FC_Net forward pass.

    x: (N, fc_in_features)
    params: w1..w4 stored as (in, out) (i.e. transposed nn.Linear.weight),
            b1..b4 as (out,). Returns (N, num_class) in out_dtype (default x.dtype).
    """
    w1, b1 = params["w1"], params["b1"]
    w2, b2 = params["w2"], params["b2"]
    w3, b3 = params["w3"], params["b3"]
    w4, b4 = params["w4"], params["b4"]

    N, f_in = x.shape
    n_out = w4.shape[1]
    out_dtype = x.dtype if out_dtype is None else out_dtype

    # ---- Fold the four affine layers into one (tiny matmuls, done by XLA).
    f32 = jnp.float32
    w_c = w1.astype(f32) @ w2.astype(f32) @ w3.astype(f32) @ w4.astype(f32)
    b_c = ((b1.astype(f32) @ w2.astype(f32) + b2.astype(f32))
           @ w3.astype(f32) + b3.astype(f32)) @ w4.astype(f32) + b4.astype(f32)
    wt = w_c.T                          # (n_out, f_in)
    bc = b_c.reshape(n_out, 1)          # (n_out, 1)

    # ---- Batch on the lane axis: pick a lane-aligned (multiple-of-128) tile.
    n_round = ((N + 127) // 128) * 128
    tile_n = max(128, (min(tile_n, n_round) // 128) * 128)
    # Keep >=4 grid steps when the batch is large enough (pipelining depth,
    # and lets dimension_semantics=("parallel",) shard across v7x's 2 TCs).
    min_steps = 4
    if n_round >= min_steps * 128 and n_round // tile_n < min_steps:
        tile_n = max(128, ((n_round // min_steps) // 128) * 128)
    n_pad = pl.cdiv(N, tile_n) * tile_n

    # Lane-dense input: batch on lanes. For f_in == 1 this transpose is a reshape.
    xt = jnp.pad(x.T, ((0, 0), (0, n_pad - N)))       # (f_in, n_pad)

    def full_block(arr):
        # Tiny weight/bias: full-array block, VMEM-resident for every grid step.
        return pl.BlockSpec(arr.shape, lambda i: (0, 0))

    out_t = pl.pallas_call(
        _fc_affine_kernel,
        out_shape=jax.ShapeDtypeStruct((n_out, n_pad), out_dtype),
        grid=(n_pad // tile_n,),
        in_specs=[
            pl.BlockSpec((f_in, tile_n), lambda i: (0, i)),
            full_block(wt),
            full_block(bc),
        ],
        out_specs=pl.BlockSpec((n_out, tile_n), lambda i: (0, i)),
        compiler_params=pltpu.CompilerParams(
            dimension_semantics=("parallel",)),
    )(xt, wt, bc)

    # Padded lane columns [N, n_pad) hold bias-only garbage; slice them off here
    # and never expose them downstream.
    return out_t.T[:N]


if __name__ == "__main__":
    key = jax.random.PRNGKey(0)
    ks = jax.random.split(key, 9)

    fc_in_features, num_class = 1, 7
    params = {
        "w1": jax.random.normal(ks[1], (fc_in_features, 16), jnp.float32) * 0.5,
        "b1": jax.random.normal(ks[2], (16,), jnp.float32) * 0.1,
        "w2": jax.random.normal(ks[3], (16, 8), jnp.float32) * 0.5,
        "b2": jax.random.normal(ks[4], (8,), jnp.float32) * 0.1,
        "w3": jax.random.normal(ks[5], (8, 7), jnp.float32) * 0.5,
        "b3": jax.random.normal(ks[6], (7,), jnp.float32) * 0.1,
        "w4": jax.random.normal(ks[7], (7, num_class), jnp.float32) * 0.5,
        "b4": jax.random.normal(ks[8], (num_class,), jnp.float32) * 0.1,
    }

    # Pure-JAX reference == PyTorch fc4(fc3(fc2(fc1(x)))) with W stored (in,out).
    def reference(x):
        ref = x
        for wk, bk in (("w1", "b1"), ("w2", "b2"), ("w3", "b3"), ("w4", "b4")):
            ref = ref @ params[wk] + params[bk]
        return ref

    # Small batch (single grid step) and a larger batch (multi-step grid,
    # exercises padding + lane tiling).
    for batch in (8, 1000):
        x = jax.random.normal(ks[0], (batch, fc_in_features), dtype=jnp.float32)
        out = jax.block_until_ready(fc_net_forward(x, params))
        ref = reference(x)
        assert out.shape == (batch, num_class), out.shape
        err = float(jnp.max(jnp.abs(out - ref)))
        assert jnp.allclose(out, ref, atol=1e-4, rtol=1e-5), err

    print("KERNEL_OK")
</pallas_src>

<mosaic_0001>
module attributes {stable_mosaic.version = 11 : i64} {
  func.func @_fc_affine_kernel(%arg0: i32, %arg1: memref<1x128xf32, #tpu.memory_space<vmem>>, %arg2: memref<7x1xf32, #tpu.memory_space<vmem>>, %arg3: memref<7x1xf32, #tpu.memory_space<vmem>>, %arg4: memref<7x128xf32, #tpu.memory_space<vmem>>) attributes {dimension_semantics = [#tpu.dimension_semantics<parallel>], iteration_bounds = array<i64: 1>, scalar_prefetch = 0 : i64, scratch_operands = 0 : i64, tpu.core_type = #tpu.core_type<tc>, window_params = [{transform_indices = @transform_0, window_bounds = array<i64: 1, 128>}, {pipeline_mode = #tpu.pipeline_mode<synchronous>, transform_indices = @transform_1, window_bounds = array<i64: 7, 1>}, {pipeline_mode = #tpu.pipeline_mode<synchronous>, transform_indices = @transform_2, window_bounds = array<i64: 7, 1>}, {transform_indices = @transform_3, window_bounds = array<i64: 7, 128>}]} {
    %c0 = arith.constant 0 : index
    %c0_0 = arith.constant 0 : index
    %0 = vector.load %arg2[%c0, %c0_0] : memref<7x1xf32, #tpu.memory_space<vmem>>, vector<7x1xf32>
    %c0_1 = arith.constant 0 : index
    %c0_2 = arith.constant 0 : index
    %1 = vector.load %arg3[%c0_1, %c0_2] : memref<7x1xf32, #tpu.memory_space<vmem>>, vector<7x1xf32>
    %2 = vector.shape_cast %1 : vector<7x1xf32> to vector<7x1xf32>
    %3 = vector.broadcast %2 : vector<7x1xf32> to vector<7x128xf32>
    %c0_3 = arith.constant 0 : index
    %c0_4 = arith.constant 0 : index
    %4 = vector.load %arg1[%c0_3, %c0_4] : memref<1x128xf32, #tpu.memory_space<vmem>>, vector<1x128xf32>
    %5 = vector.broadcast %0 : vector<7x1xf32> to vector<7x128xf32>
    %6 = vector.broadcast %4 : vector<1x128xf32> to vector<7x128xf32>
    %7 = arith.mulf %5, %6 : vector<7x128xf32>
    %8 = arith.addf %3, %7 : vector<7x128xf32>
    %c0_5 = arith.constant 0 : index
    %c0_6 = arith.constant 0 : index
    %9 = vector.load %arg4[%c0_5, %c0_6] : memref<7x128xf32, #tpu.memory_space<vmem>>, vector<7x128xf32>
    tpu.vector_store %arg4[%c0_5, %c0_6], %8 {strides = array<i32>} : memref<7x128xf32, #tpu.memory_space<vmem>>, vector<7x128xf32>,
    return
  }
  func.func @transform_0(%arg0: i32) -> (i32, i32) {
    %c0_i32 = arith.constant 0 : i32
    %c0_i32_0 = arith.constant 0 : i32
    return %c0_i32, %arg0 : i32, i32
  }
  func.func @transform_1(%arg0: i32) -> (i32, i32) {
    %c0_i32 = arith.constant 0 : i32
    %c0_i32_0 = arith.constant 0 : i32
    %c0_i32_1 = arith.constant 0 : i32
    return %c0_i32, %c0_i32_0 : i32, i32
  }
  func.func @transform_2(%arg0: i32) -> (i32, i32) {
    %c0_i32 = arith.constant 0 : i32
    %c0_i32_0 = arith.constant 0 : i32
    %c0_i32_1 = arith.constant 0 : i32
    return %c0_i32, %c0_i32_0 : i32, i32
  }
  func.func @transform_3(%arg0: i32) -> (i32, i32) {
    %c0_i32 = arith.constant 0 : i32
    %c0_i32_0 = arith.constant 0 : i32
    return %c0_i32, %arg0 : i32, i32
  }
}

</mosaic_0001>

<llo_original>
// kernel: tpu_custom_call.1
$region0: #{tpu_custom_call.1}
  #allocation0 [shape = 'u32[]', space=smem, size = 0x4, offset = 0x4, fixed_abs, tag = 'smem constant byte address 0x4 - core index']
  #allocation1 [shape = 'u32[144,128]{1,0:T(1,128)}', space=vmem, size = 0x12000, scoped, tag = 'internal scratch']
  %s0 = inlined_call_operand.vmem [shape: f32[1,128], index: 0, kind: input, shape index: {}]
  %s1 = inlined_call_operand.vmem [shape: f32[7,1], index: 1, kind: input, shape index: {}]
  %s2 = inlined_call_operand.vmem [shape: f32[7,1], index: 2, kind: input, shape index: {}]
  %s3 = inlined_call_operand.hbm [shape: f32[7,128], index: 3, kind: output, shape index: {}]
  %s4 = sld [smem:[#allocation0]]
  $region22: #{tpu_custom_call.1} parent=0
    _
  %s6 = ssub.s32 1, %s4
  %s7 = scalar_select 0, %s6, %s4
  $region1: #{tpu_custom_call.1} parent=0
    #allocation2 [shape = 'u8[4096]{0}', space=vmem, size = 0x1000, scoped, tag = 'output window, operand 0, single buffered']
    #allocation3 [shape = 's32[1]{0}', space=sflag, size = 0x4, scoped, tag = 'scoped memory for tpu_custom_call.1']
    %8 = vsyncpa [#allocation3], 0
    // Predicated region
    $region2: #{tpu_custom_call.1} parent=1 // pred_check
      _
    $region3: #{tpu_custom_call.1} parent=1 // pred_check_branch
      %10 = sbr.rel (0) target = $region5
    $region4: #{tpu_custom_call.1} parent=1 // pred_region
      _
    $region5: #{tpu_custom_call.1} parent=1 // pred_fallthru
      _
    // Predicated region
    $region6: #{tpu_custom_call.1} parent=1 // pred_check
      _
    $region7: #{tpu_custom_call.1} parent=1 // pred_check_branch
      %12 = sbr.rel (0) target = $region9
    $region8: #{tpu_custom_call.1} parent=1 // pred_region
      _
    $region9: #{tpu_custom_call.1} parent=1 // pred_fallthru
      _
    // Predicated region
    $region10: #{tpu_custom_call.1} parent=1 // pred_check
      _
    $region11: #{tpu_custom_call.1} parent=1 // pred_check_branch
      %14 = sbr.rel (0) target = $region13
    $region12: #{tpu_custom_call.1} parent=1 // pred_region
      _
    $region13: #{tpu_custom_call.1} parent=1 // pred_fallthru
      _
    %v15 = vld [vmem:[%s1] sm:$0x7f]
    %v16 = vld [vmem:[%s2] sm:$0x7f]
    %18 = vset.pattern.permute.xlu0 0
    %19 = vperm.xlu0 %18, %v16
    %v20 = vpop.permute.xlu0 %19
    %v22 = vld [vmem:[%s0] sm:$0x1]
    %24 = vset.pattern.permute.xlu0 0
    %25 = vperm.xlu0 %24, %v15
    %v26 = vpop.permute.xlu0 %25
    %v29 = vlaneseq
    %v30 = vshrl.u32 %v29, 7
    %v31 = vsub.s32 0, %v30
    %v32 = vrot.slane %v22, %v31
    %v34 = vmul.f32 %v26, %v32
    %v35 = vadd.f32 %v20, %v34
    %36 = vst [vmem:[#allocation2] sm:$0x7f] %v35
    // Predicated region
    $region14: #{tpu_custom_call.1} parent=1 // pred_check
      _
    $region15: #{tpu_custom_call.1} parent=1 // pred_check_branch
      %38 = sbr.rel (0) target = $region17
    $region16: #{tpu_custom_call.1} parent=1 // pred_region
      %s40 = ssub.s32 128, 128
      %41 = vsyncadd [#allocation3], %s40
      %s43 = sshll.u32 [#allocation2], 4
      %s44 = int_to_ptr.vmem [resolvable:$true] %s43
      %46 = dma.vmem_to_hbm [thread:$0]  %s44, 128, %s3, [#allocation3]
    $region17: #{tpu_custom_call.1} parent=1 // pred_fallthru
      _
    // Predicated region
    $region18: #{tpu_custom_call.1} parent=1 // pred_check
      _
    $region19: #{tpu_custom_call.1} parent=1 // pred_check_branch
      %48 = sbr.rel (0) target = $region21
    $region20: #{tpu_custom_call.1} parent=1 // pred_region
      %49 = dma.done [#allocation3], 128
    $region21: #{tpu_custom_call.1} parent=1 // pred_fallthru
      _
    %50 = vsyncpa [#allocation3], 1

</llo_original>
